<compile_context>
chip_gen: v5e
topology: v5e:2x2
jax: 0.10.0
libtpu: 0.0.40
codegen_flags: <defaults>
</compile_context>

<pallas_src>
import numpy as np
import jax
import jax.numpy as jnp
from jax.experimental import pallas as pl
from jax.experimental.pallas import tpu as pltpu

LANE = 128
SUBLANE = 8


def _round_up(x, m):
    return ((x + m - 1) // m) * m


def make_kernel_layer_kernel(lambda_s, lambda_2, n_in, n_hid):
    """Kernel body with static lambdas and true (unpadded) extents baked in."""
    inv_n = 1.0 / float(n_in * n_hid)
    c_s = float(lambda_s) * inv_n
    c_2 = float(lambda_2) * inv_n

    def kernel(x_ref, w_ref, u_ref, v_ref, b_ref, y_ref, reg_ref):
        u = u_ref[...]                       # (p_in, p_dim)
        v = v_ref[...]                       # (p_hid, p_dim)
        p_in, p_dim = u.shape
        p_hid = v.shape[0]

        # dist^2 = ||u||^2 + ||v||^2 - 2 * u @ v^T  (heavy term on the MXU).
        u_sq = jnp.sum(u * u, axis=-1, keepdims=True)             # (p_in, 1)
        ones_row = jnp.ones((1, p_dim), jnp.float32)
        v_sq = jax.lax.dot_general(                               # (1, p_hid)
            ones_row, v * v, (((1,), (1,)), ((), ())),
            preferred_element_type=jnp.float32)
        uv = jax.lax.dot_general(                                 # (p_in, p_hid)
            u, v, (((1,), (1,)), ((), ())),
            preferred_element_type=jnp.float32)
        dist2 = (u_sq - 2.0 * uv) + v_sq
        w_hat = jnp.maximum(1.0 - dist2, 0.0)                     # (p_in, p_hid)

        W = w_ref[...]                                            # (p_in, p_hid)
        W_eff = W * w_hat                                         # pad rows of W are 0

        # y = sigmoid(x @ W_eff + b); lane-dense store (p_hid % 128 == 0).
        y = jnp.dot(x_ref[...], W_eff, preferred_element_type=jnp.float32)
        y = y + b_ref[...]
        y_ref[...] = jax.nn.sigmoid(y).astype(y_ref.dtype)

        # reg = lambda_s * mean(w_hat^2) + lambda_2 * mean(W^2) over the TRUE
        # (n_in, n_hid) extent. W's padding is zero -> no mask needed; w_hat's
        # padded rows/cols can be non-zero -> mask them out of the sum.
        rows = jax.lax.broadcasted_iota(jnp.int32, (p_in, p_hid), 0)
        cols = jax.lax.broadcasted_iota(jnp.int32, (p_in, p_hid), 1)
        valid = (rows < n_in) & (cols < n_hid)
        w_hat_sq = jnp.where(valid, w_hat * w_hat, 0.0)
        reg_ref[0, 0] = c_s * jnp.sum(w_hat_sq) + c_2 * jnp.sum(W * W)

    return kernel


def kernel_layer_forward(x, W, u, v, b, lambda_s, lambda_2):
    """x: (B, n_in); W: (n_in, n_hid); u: (n_in, n_dim); v: (n_hid, n_dim);
    b: (1, n_hid). Returns (y (B, n_hid), scalar reg)."""
    B, n_in = x.shape
    n_hid = W.shape[1]
    n_dim = u.shape[1]

    # Lane-dense padded extents.
    p_in = _round_up(n_in, LANE)
    p_hid = _round_up(n_hid, LANE)
    p_dim = _round_up(n_dim, LANE)

    # Batch tiling: single tile for small batches, MXU-sized 256-row tiles
    # otherwise (shardable across v7x's 2 TensorCores via "parallel").
    if B <= 256:
        tm = _round_up(B, SUBLANE)
        p_b = tm
    else:
        tm = 256
        p_b = _round_up(B, tm)
    n_tiles = p_b // tm

    def pad2(a, s0, s1):
        return jnp.pad(a, ((0, s0 - a.shape[0]), (0, s1 - a.shape[1])))

    x_p = pad2(x, p_b, p_in)
    W_p = pad2(W, p_in, p_hid)
    u_p = pad2(u, p_in, p_dim)
    v_p = pad2(v, p_hid, p_dim)
    b_p = pad2(b, 1, p_hid)

    y_p, reg = pl.pallas_call(
        make_kernel_layer_kernel(lambda_s, lambda_2, n_in, n_hid),
        out_shape=(
            jax.ShapeDtypeStruct((p_b, p_hid), jnp.float32),
            jax.ShapeDtypeStruct((n_tiles, 1), jnp.float32),
        ),
        grid=(n_tiles,),
        in_specs=[
            pl.BlockSpec((tm, p_in), lambda i: (i, 0)),       # x   (batch-tiled)
            pl.BlockSpec((p_in, p_hid), lambda i: (0, 0)),    # W   (resident)
            pl.BlockSpec((p_in, p_dim), lambda i: (0, 0)),    # u   (resident)
            pl.BlockSpec((p_hid, p_dim), lambda i: (0, 0)),   # v   (resident)
            pl.BlockSpec((1, p_hid), lambda i: (0, 0)),       # b   (resident)
        ],
        out_specs=(
            pl.BlockSpec((tm, p_hid), lambda i: (i, 0)),      # y   (lane-dense)
            pl.BlockSpec((1, 1), lambda i: (i, 0),
                         memory_space=pltpu.MemorySpace.SMEM),  # reg per tile
        ),
        compiler_params=pltpu.CompilerParams(
            dimension_semantics=("parallel",)),
    )(x_p, W_p, u_p, v_p, b_p)

    return y_p[:B, :n_hid], reg[0, 0]


def _xavier_uniform(key, shape, fan_in, fan_out, gain):
    limit = gain * np.sqrt(6.0 / (fan_in + fan_out))
    return jax.random.uniform(key, shape, jnp.float32, -limit, limit)


def _reference(x, W, u, v, b, lambda_s, lambda_2):
    """Pure-JAX reference mirroring the PyTorch forward."""
    diff = u[:, None, :] - v[None, :, :]
    dist = jnp.sqrt(jnp.sum(diff * diff, axis=-1))
    w_hat = jnp.maximum(1.0 - dist ** 2, 0.0)
    sparse_reg = jnp.mean(w_hat ** 2)
    l2_reg = jnp.mean(W ** 2)
    W_eff = W * w_hat
    y = jax.nn.sigmoid(x @ W_eff + b)
    return y, lambda_s * sparse_reg + lambda_2 * l2_reg


if __name__ == "__main__":
    # Small shapes consistent with the module's forward.
    batch, n_in, n_hid, n_dim = 8, 32, 32, 8
    lambda_s, lambda_2 = 0.006, 20.0
    relu_gain = float(np.sqrt(2.0))  # torch.nn.init.calculate_gain('relu')

    root = jax.random.PRNGKey(0)
    k_x, k_w, k_u, k_v = jax.random.split(root, 4)

    # Deterministic parameter init (xavier_uniform with relu gain, as in __init__).
    W = _xavier_uniform(k_w, (n_in, n_hid), fan_in=n_in, fan_out=n_hid, gain=relu_gain)
    # torch fan for u (n_in, 1, n_dim): fan_in = 1*n_dim, fan_out = n_in*n_dim
    u = _xavier_uniform(k_u, (n_in, n_dim), fan_in=n_dim, fan_out=n_in * n_dim, gain=relu_gain)
    # torch fan for v (1, n_hid, n_dim): fan_in = n_hid*n_dim, fan_out = n_dim
    v = _xavier_uniform(k_v, (n_hid, n_dim), fan_in=n_hid * n_dim, fan_out=n_dim, gain=relu_gain)
    b = jnp.zeros((1, n_hid), jnp.float32)   # nn.init.zeros_(self.b)

    x = jax.random.normal(k_x, (batch, n_in), jnp.float32)

    y, reg = kernel_layer_forward(x, W, u, v, b, lambda_s, lambda_2)
    y = jax.block_until_ready(y)
    reg = jax.block_until_ready(reg)

    y_ref, reg_ref = _reference(x, W, u, v, b, lambda_s, lambda_2)
    np.testing.assert_allclose(np.asarray(y), np.asarray(y_ref), rtol=1e-5, atol=1e-5)
    np.testing.assert_allclose(np.asarray(reg), np.asarray(reg_ref), rtol=1e-5, atol=1e-5)

    print("KERNEL_OK")
</pallas_src>

<mosaic_0001>
module attributes {stable_mosaic.version = 11 : i64} {
  func.func @kernel(%arg0: i32, %arg1: memref<8x128xf32, #tpu.memory_space<vmem>>, %arg2: memref<128x128xf32, #tpu.memory_space<vmem>>, %arg3: memref<128x128xf32, #tpu.memory_space<vmem>>, %arg4: memref<128x128xf32, #tpu.memory_space<vmem>>, %arg5: memref<1x128xf32, #tpu.memory_space<vmem>>, %arg6: memref<8x128xf32, #tpu.memory_space<vmem>>, %arg7: memref<1x1xf32, #tpu.memory_space<smem>>) attributes {dimension_semantics = [#tpu.dimension_semantics<parallel>], iteration_bounds = array<i64: 1>, scalar_prefetch = 0 : i64, scratch_operands = 0 : i64, tpu.core_type = #tpu.core_type<tc>, window_params = [{transform_indices = @transform_0, window_bounds = array<i64: 8, 128>}, {pipeline_mode = #tpu.pipeline_mode<synchronous>, transform_indices = @transform_1, window_bounds = array<i64: 128, 128>}, {pipeline_mode = #tpu.pipeline_mode<synchronous>, transform_indices = @transform_2, window_bounds = array<i64: 128, 128>}, {pipeline_mode = #tpu.pipeline_mode<synchronous>, transform_indices = @transform_3, window_bounds = array<i64: 128, 128>}, {pipeline_mode = #tpu.pipeline_mode<synchronous>, transform_indices = @transform_4, window_bounds = array<i64: 1, 128>}, {transform_indices = @transform_5, window_bounds = array<i64: 8, 128>}, {transform_indices = @transform_6, window_bounds = array<i64: 1, 1>}]} {
    %c0 = arith.constant 0 : index
    %c0_0 = arith.constant 0 : index
    %0 = vector.load %arg3[%c0, %c0_0] : memref<128x128xf32, #tpu.memory_space<vmem>>, vector<128x128xf32>
    %c0_1 = arith.constant 0 : index
    %c0_2 = arith.constant 0 : index
    %1 = vector.load %arg4[%c0_1, %c0_2] : memref<128x128xf32, #tpu.memory_space<vmem>>, vector<128x128xf32>
    %2 = arith.mulf %0, %0 : vector<128x128xf32>
    %cst = arith.constant dense<0.000000e+00> : vector<128xf32>
    %3 = vector.multi_reduction <add>, %2, %cst [1] : vector<128x128xf32> to vector<128xf32>
    %4 = vector.shape_cast %3 : vector<128xf32> to vector<128x1xf32>
    %cst_3 = arith.constant 1.000000e+00 : f32
    %5 = vector.broadcast %cst_3 : f32 to vector<1x128xf32>
    %6 = arith.mulf %1, %1 : vector<128x128xf32>
    %cst_4 = arith.constant dense<0.000000e+00> : vector<1x128xf32>
    %7 = tpu.matmul %5, %6, %cst_4 {dimension_numbers = #tpu.dot_dimension_numbers<[1], [1], [0], [0], [0, 0, 1, 0], [], []>} : vector<1x128xf32>, vector<128x128xf32>, vector<1x128xf32> -> vector<1x128xf32>
    %cst_5 = arith.constant dense<0.000000e+00> : vector<128x128xf32>
    %8 = tpu.matmul %0, %1, %cst_5 {dimension_numbers = #tpu.dot_dimension_numbers<[1], [1], [0], [0], [0, 0, 1, 0], [], []>} : vector<128x128xf32>, vector<128x128xf32>, vector<128x128xf32> -> vector<128x128xf32>
    %cst_6 = arith.constant 2.000000e+00 : f32
    %9 = vector.broadcast %cst_6 : f32 to vector<128x128xf32>
    %10 = arith.mulf %9, %8 : vector<128x128xf32>
    %11 = vector.broadcast %4 : vector<128x1xf32> to vector<128x128xf32>
    %12 = arith.subf %11, %10 : vector<128x128xf32>
    %13 = vector.broadcast %7 : vector<1x128xf32> to vector<128x128xf32>
    %14 = arith.addf %12, %13 : vector<128x128xf32>
    %cst_7 = arith.constant 1.000000e+00 : f32
    %15 = vector.broadcast %cst_7 : f32 to vector<128x128xf32>
    %16 = arith.subf %15, %14 : vector<128x128xf32>
    %cst_8 = arith.constant 0.000000e+00 : f32
    %17 = vector.broadcast %cst_8 : f32 to vector<128x128xf32>
    %18 = arith.maximumf %16, %17 : vector<128x128xf32>
    %c0_9 = arith.constant 0 : index
    %c0_10 = arith.constant 0 : index
    %19 = vector.load %arg2[%c0_9, %c0_10] : memref<128x128xf32, #tpu.memory_space<vmem>>, vector<128x128xf32>
    %20 = arith.mulf %19, %18 : vector<128x128xf32>
    %c0_11 = arith.constant 0 : index
    %c0_12 = arith.constant 0 : index
    %21 = vector.load %arg1[%c0_11, %c0_12] : memref<8x128xf32, #tpu.memory_space<vmem>>, vector<8x128xf32>
    %cst_13 = arith.constant dense<0.000000e+00> : vector<8x128xf32>
    %22 = tpu.matmul %21, %20, %cst_13 {dimension_numbers = #tpu.dot_dimension_numbers<[1], [0], [0], [1], [0, 0, 1, 1], [], []>} : vector<8x128xf32>, vector<128x128xf32>, vector<8x128xf32> -> vector<8x128xf32>
    %c0_14 = arith.constant 0 : index
    %c0_15 = arith.constant 0 : index
    %23 = vector.load %arg5[%c0_14, %c0_15] : memref<1x128xf32, #tpu.memory_space<vmem>>, vector<1x128xf32>
    %24 = vector.broadcast %23 : vector<1x128xf32> to vector<8x128xf32>
    %25 = arith.addf %22, %24 : vector<8x128xf32>
    %26 = arith.negf %25 : vector<8x128xf32>
    %27 = math.exp %26 : vector<8x128xf32>
    %cst_16 = arith.constant 1.000000e+00 : f32
    %28 = vector.broadcast %cst_16 : f32 to vector<8x128xf32>
    %29 = arith.addf %28, %27 : vector<8x128xf32>
    %30 = arith.divf %28, %29 : vector<8x128xf32>
    %c0_17 = arith.constant 0 : index
    %c0_18 = arith.constant 0 : index
    %31 = vector.load %arg6[%c0_17, %c0_18] : memref<8x128xf32, #tpu.memory_space<vmem>>, vector<8x128xf32>
    tpu.vector_store %arg6[%c0_17, %c0_18], %30 {strides = array<i32>} : memref<8x128xf32, #tpu.memory_space<vmem>>, vector<8x128xf32>,
    %32 = tpu.iota {dimensions = array<i32: 0>} : vector<128x128xi32>
    %33 = tpu.iota {dimensions = array<i32: 1>} : vector<128x128xi32>
    %c32_i32 = arith.constant 32 : i32
    %34 = vector.broadcast %c32_i32 : i32 to vector<128x128xi32>
    %35 = arith.cmpi slt, %32, %34 : vector<128x128xi32>
    %c32_i32_19 = arith.constant 32 : i32
    %36 = vector.broadcast %c32_i32_19 : i32 to vector<128x128xi32>
    %37 = arith.cmpi slt, %33, %36 : vector<128x128xi32>
    %38 = arith.andi %35, %37 : vector<128x128xi1>
    %39 = arith.mulf %18, %18 : vector<128x128xf32>
    %cst_20 = arith.constant 0.000000e+00 : f32
    %40 = vector.broadcast %cst_20 : f32 to vector<128x128xf32>
    %41 = arith.select %38, %39, %40 : vector<128x128xi1>, vector<128x128xf32>
    %42 = vector.shape_cast %41 : vector<128x128xf32> to vector<1x128x128xf32>
    %cst_21 = arith.constant dense<0.000000e+00> : vector<1xf32>
    %43 = vector.multi_reduction <add>, %42, %cst_21 [1, 2] : vector<1x128x128xf32> to vector<1xf32>
    %44 = vector.shape_cast %43 : vector<1xf32> to vector<1x1x1xf32>
    %45 = vector.extract %44[0, 0, 0] : f32 from vector<1x1x1xf32>
    %cst_22 = arith.constant 5.85937505E-6 : f32
    %46 = arith.mulf %cst_22, %45 : f32
    %47 = arith.mulf %19, %19 : vector<128x128xf32>
    %48 = vector.shape_cast %47 : vector<128x128xf32> to vector<1x128x128xf32>
    %cst_23 = arith.constant dense<0.000000e+00> : vector<1xf32>
    %49 = vector.multi_reduction <add>, %48, %cst_23 [1, 2] : vector<1x128x128xf32> to vector<1xf32>
    %50 = vector.shape_cast %49 : vector<1xf32> to vector<1x1x1xf32>
    %51 = vector.extract %50[0, 0, 0] : f32 from vector<1x1x1xf32>
    %cst_24 = arith.constant 0.01953125 : f32
    %52 = arith.mulf %cst_24, %51 : f32
    %53 = arith.addf %46, %52 : f32
    %c0_25 = arith.constant 0 : index
    %c0_26 = arith.constant 0 : index
    %54 = memref.load %arg7[%c0_25, %c0_26] : memref<1x1xf32, #tpu.memory_space<smem>>
    memref.store %53, %arg7[%c0_25, %c0_26] : memref<1x1xf32, #tpu.memory_space<smem>>
    return
  }
  func.func @transform_0(%arg0: i32) -> (i32, i32) {
    %c0_i32 = arith.constant 0 : i32
    %c0_i32_0 = arith.constant 0 : i32
    return %arg0, %c0_i32 : i32, i32
  }
  func.func @transform_1(%arg0: i32) -> (i32, i32) {
    %c0_i32 = arith.constant 0 : i32
    %c0_i32_0 = arith.constant 0 : i32
    %c0_i32_1 = arith.constant 0 : i32
    return %c0_i32, %c0_i32_0 : i32, i32
  }
  func.func @transform_2(%arg0: i32) -> (i32, i32) {
    %c0_i32 = arith.constant 0 : i32
    %c0_i32_0 = arith.constant 0 : i32
    %c0_i32_1 = arith.constant 0 : i32
    return %c0_i32, %c0_i32_0 : i32, i32
  }
  func.func @transform_3(%arg0: i32) -> (i32, i32) {
    %c0_i32 = arith.constant 0 : i32
    %c0_i32_0 = arith.constant 0 : i32
    %c0_i32_1 = arith.constant 0 : i32
    return %c0_i32, %c0_i32_0 : i32, i32
  }
  func.func @transform_4(%arg0: i32) -> (i32, i32) {
    %c0_i32 = arith.constant 0 : i32
    %c0_i32_0 = arith.constant 0 : i32
    %c0_i32_1 = arith.constant 0 : i32
    return %c0_i32, %c0_i32_0 : i32, i32
  }
  func.func @transform_5(%arg0: i32) -> (i32, i32) {
    %c0_i32 = arith.constant 0 : i32
    %c0_i32_0 = arith.constant 0 : i32
    return %arg0, %c0_i32 : i32, i32
  }
  func.func @transform_6(%arg0: i32) -> (i32, i32) {
    %c0_i32 = arith.constant 0 : i32
    %c0_i32_0 = arith.constant 0 : i32
    return %arg0, %c0_i32 : i32, i32
  }
}

</mosaic_0001>

<llo_original>
// kernel: tpu_custom_call.1
$region0: #{tpu_custom_call.1}
  #allocation0 [shape = 'u32[]', space=smem, size = 0x4, offset = 0x4, fixed_abs, tag = 'smem constant byte address 0x4 - core index']
  #allocation1 [shape = 'u32[72,128]{1,0:T(1,128)}', space=vmem, size = 0x9000, scoped, tag = 'internal scratch']
  %s0 = inlined_call_operand.hbm [shape: f32[8,128], index: 0, kind: input, shape index: {}]
  %s1 = inlined_call_operand.hbm [shape: f32[128,128], index: 1, kind: input, shape index: {}]
  %s2 = inlined_call_operand.hbm [shape: f32[128,128], index: 2, kind: input, shape index: {}]
  %s3 = inlined_call_operand.hbm [shape: f32[128,128], index: 3, kind: input, shape index: {}]
  %s4 = inlined_call_operand.vmem [shape: f32[1,128], index: 4, kind: input, shape index: {}]
  %s5 = inlined_call_operand.hbm [shape: f32[8,128], index: 5, kind: output, shape index: {0}]
  %s6 = inlined_call_operand.hbm [shape: f32[1,1], index: 6, kind: output, shape index: {1}]
  %7 = xla_tuple %s5, %s6
  %s8 = sld [smem:[#allocation0]]
  $region54: #{tpu_custom_call.1} parent=0
    _
  %s10 = ssub.s32 1, %s8
  %s11 = scalar_select 0, %s10, %s8
  $region1: #{tpu_custom_call.1} parent=0
    #allocation2 [shape = 'u8[4096]{0}', space=vmem, size = 0x1000, scoped, tag = 'input window, operand 0, single buffered']
    #allocation3 [shape = 's32[1]{0}', space=sflag, size = 0x4, scoped, tag = 'scoped memory for tpu_custom_call.1']
    #allocation4 [shape = 's32[1]{0}', space=sflag, size = 0x4, scoped, tag = 'scoped memory for tpu_custom_call.1']
    #allocation5 [shape = 's32[1]{0}', space=sflag, size = 0x4, scoped, tag = 'scoped memory for tpu_custom_call.1']
    #allocation6 [shape = 'u8[65536]{0}', space=vmem, size = 0x10000, scoped, tag = 'input window, operand 1, single buffered']
    #allocation7 [shape = 's32[1]{0}', space=sflag, size = 0x4, scoped, tag = 'scoped memory for tpu_custom_call.1']
    #allocation8 [shape = 'u8[65536]{0}', space=vmem, size = 0x10000, scoped, tag = 'input window, operand 2, single buffered']
    #allocation9 [shape = 'u8[65536]{0}', space=vmem, size = 0x10000, scoped, tag = 'input window, operand 3, single buffered']
    #allocation10 [shape = 's32[1]{0}', space=sflag, size = 0x4, scoped, tag = 'scoped memory for tpu_custom_call.1']
    #allocation11 [shape = 'u8[4096]{0}', space=vmem, size = 0x1000, scoped, tag = 'output window, operand 0, single buffered']
    #allocation12 [shape = 'u8[512]{0}', space=smem, size = 0x200, scoped, tag = 'output window, operand 1, single buffered']
    %12 = vsyncpa [#allocation3], 0
    %13 = vsyncpa [#allocation7], 0
    %14 = vsyncpa [#allocation10], 0
    %15 = vsyncpa [#allocation4], 0
    %16 = vsyncpa [#allocation5], 0
    // Predicated region
    $region2: #{tpu_custom_call.1} parent=1 // pred_check
      _
    $region3: #{tpu_custom_call.1} parent=1 // pred_check_branch
      %18 = sbr.rel (0) target = $region5
    $region4: #{tpu_custom_call.1} parent=1 // pred_region
      %20 = vsyncadd [#allocation3], 0
      %s22 = sshll.u32 %s0, 4
      %s23 = int_to_ptr.hbm [resolvable:$true] %s22
      %s24 = sshll.u32 [#allocation2], 4
      %s25 = int_to_ptr.vmem [resolvable:$true] %s24
      %27 = dma.hbm_to_vmem [thread:$0]  %s23, 128, %s25, [#allocation3]
    $region5: #{tpu_custom_call.1} parent=1 // pred_fallthru
      _
    // Predicated region
    $region6: #{tpu_custom_call.1} parent=1 // pred_check
      _
    $region7: #{tpu_custom_call.1} parent=1 // pred_check_branch
      %29 = sbr.rel (0) target = $region9
    $region8: #{tpu_custom_call.1} parent=1 // pred_region
      %31 = vsyncadd [#allocation7], 0
      %s32 = sshll.u32 %s1, 4
      %s33 = int_to_ptr.hbm [resolvable:$true] %s32
      %s34 = sshll.u32 [#allocation6], 4
      %s35 = int_to_ptr.vmem [resolvable:$true] %s34
      %40 = dma.hbm_to_vmem [thread:$0]  %s33, 2048, %s35, [#allocation7], 128, 128, 8
    $region9: #{tpu_custom_call.1} parent=1 // pred_fallthru
      _
    // Predicated region
    $region10: #{tpu_custom_call.1} parent=1 // pred_check
      _
    $region11: #{tpu_custom_call.1} parent=1 // pred_check_branch
      %42 = sbr.rel (0) target = $region13
    $region12: #{tpu_custom_call.1} parent=1 // pred_region
      %44 = vsyncadd [#allocation7], 0
      %s45 = sshll.u32 %s2, 4
      %s46 = int_to_ptr.hbm [resolvable:$true] %s45
      %s47 = sshll.u32 [#allocation8], 4
      %s48 = int_to_ptr.vmem [resolvable:$true] %s47
      %53 = dma.hbm_to_vmem [thread:$0]  %s46, 2048, %s48, [#allocation7], 128, 128, 8
    $region13: #{tpu_custom_call.1} parent=1 // pred_fallthru
      _
    // Predicated region
    $region14: #{tpu_custom_call.1} parent=1 // pred_check
      _
    $region15: #{tpu_custom_call.1} parent=1 // pred_check_branch
      %55 = sbr.rel (0) target = $region17
    $region16: #{tpu_custom_call.1} parent=1 // pred_region
      %57 = vsyncadd [#allocation10], 0
      %s58 = sshll.u32 %s3, 4
      %s59 = int_to_ptr.hbm [resolvable:$true] %s58
      %s60 = sshll.u32 [#allocation9], 4
      %s61 = int_to_ptr.vmem [resolvable:$true] %s60
      %66 = dma.hbm_to_vmem [thread:$0]  %s59, 2048, %s61, [#allocation10], 128, 128, 8
    $region17: #{tpu_custom_call.1} parent=1 // pred_fallthru
      _
    // Predicated region
    $region18: #{tpu_custom_call.1} parent=1 // pred_check
      _
    $region19: #{tpu_custom_call.1} parent=1 // pred_check_branch
      %68 = sbr.rel (0) target = $region21
    $region20: #{tpu_custom_call.1} parent=1 // pred_region
      _
    $region21: #{tpu_custom_call.1} parent=1 // pred_fallthru
      _
    // Predicated region
    $region22: #{tpu_custom_call.1} parent=1 // pred_check
      _
    $region23: #{tpu_custom_call.1} parent=1 // pred_check_branch
      %70 = sbr.rel (0) target = $region25
    $region24: #{tpu_custom_call.1} parent=1 // pred_region
      %72 = dma.done [#allocation3], 128
    $region25: #{tpu_custom_call.1} parent=1 // pred_fallthru
      _
    // Predicated region
    $region26: #{tpu_custom_call.1} parent=1 // pred_check
      _
    $region27: #{tpu_custom_call.1} parent=1 // pred_check_branch
      %74 = sbr.rel (0) target = $region29
    $region28: #{tpu_custom_call.1} parent=1 // pred_region
      %76 = dma.done [#allocation7], 2048
    $region29: #{tpu_custom_call.1} parent=1 // pred_fallthru
      _
    // Predicated region
    $region30: #{tpu_custom_call.1} parent=1 // pred_check
      _
    $region31: #{tpu_custom_call.1} parent=1 // pred_check_branch
      %78 = sbr.rel (0) target = $region33
    $region32: #{tpu_custom_call.1} parent=1 // pred_region
      %80 = dma.done [#allocation7], 2048
    $region33: #{tpu_custom_call.1} parent=1 // pred_fallthru
      _
    // Predicated region
    $region34: #{tpu_custom_call.1} parent=1 // pred_check
      _
    $region35: #{tpu_custom_call.1} parent=1 // pred_check_branch
      %82 = sbr.rel (0) target = $region37
    $region36: #{tpu_custom_call.1} parent=1 // pred_region
      %84 = dma.done [#allocation10], 2048
    $region37: #{tpu_custom_call.1} parent=1 // pred_fallthru
      _
    %v85 = vld [vmem:[#allocation8] sm:$0xff]
    %v86 = vld [vmem:[#allocation8 + $0x8] sm:$0xff]
    %v87 = vld [vmem:[#allocation8 + $0x10] sm:$0xff]
    %v88 = vld [vmem:[#allocation8 + $0x18] sm:$0xff]
    %v89 = vld [vmem:[#allocation8 + $0x20] sm:$0xff]
    %v90 = vld [vmem:[#allocation8 + $0x28] sm:$0xff]
    %v91 = vld [vmem:[#allocation8 + $0x30] sm:$0xff]
    %v92 = vld [vmem:[#allocation8 + $0x38] sm:$0xff]
    %v93 = vld [vmem:[#allocation8 + $0x40] sm:$0xff]
    %v94 = vld [vmem:[#allocation8 + $0x48] sm:$0xff]
    %v95 = vld [vmem:[#allocation8 + $0x50] sm:$0xff]
    %v96 = vld [vmem:[#allocation8 + $0x58] sm:$0xff]
    %v97 = vld [vmem:[#allocation8 + $0x60] sm:$0xff]
    %v98 = vld [vmem:[#allocation8 + $0x68] sm:$0xff]
    %v99 = vld [vmem:[#allocation8 + $0x70] sm:$0xff]
    %v100 = vld [vmem:[#allocation8 + $0x78] sm:$0xff]
    %v101 = vld [vmem:[#allocation9] sm:$0xff]
    %v102 = vld [vmem:[#allocation9 + $0x8] sm:$0xff]
    %v103 = vld [vmem:[#allocation9 + $0x10] sm:$0xff]
    %v104 = vld [vmem:[#allocation9 + $0x18] sm:$0xff]
    %v105 = vld [vmem:[#allocation9 + $0x20] sm:$0xff]
    %v106 = vld [vmem:[#allocation9 + $0x28] sm:$0xff]
    %v107 = vld [vmem:[#allocation9 + $0x30] sm:$0xff]
    %v108 = vld [vmem:[#allocation9 + $0x38] sm:$0xff]
    %v109 = vld [vmem:[#allocation9 + $0x40] sm:$0xff]
    %v110 = vld [vmem:[#allocation9 + $0x48] sm:$0xff]
    %v111 = vld [vmem:[#allocation9 + $0x50] sm:$0xff]
    %v112 = vld [vmem:[#allocation9 + $0x58] sm:$0xff]
    %v113 = vld [vmem:[#allocation9 + $0x60] sm:$0xff]
    %v114 = vld [vmem:[#allocation9 + $0x68] sm:$0xff]
    %v115 = vld [vmem:[#allocation9 + $0x70] sm:$0xff]
    %v116 = vld [vmem:[#allocation9 + $0x78] sm:$0xff]
    %v117 = vmul.f32 %v85, %v85
    %v118 = vmul.f32 %v86, %v86
    %v119 = vmul.f32 %v87, %v87
    %v120 = vmul.f32 %v88, %v88
    %v121 = vmul.f32 %v89, %v89
    %v122 = vmul.f32 %v90, %v90
    %v123 = vmul.f32 %v91, %v91
    %v124 = vmul.f32 %v92, %v92
    %v125 = vmul.f32 %v93, %v93
    %v126 = vmul.f32 %v94, %v94
    %v127 = vmul.f32 %v95, %v95
    %v128 = vmul.f32 %v96, %v96
    %v129 = vmul.f32 %v97, %v97
    %v130 = vmul.f32 %v98, %v98
    %v131 = vmul.f32 %v99, %v99
    %v132 = vmul.f32 %v100, %v100
    %133 = vadd.xlane.f32.xlu0 %v117
    %v134 = vpop.xlane.xlu0 %133
    %135 = vadd.xlane.f32.xlu0 %v118
    %v136 = vpop.xlane.xlu0 %135
    %137 = vadd.xlane.f32.xlu0 %v119
    %v138 = vpop.xlane.xlu0 %137
    %139 = vadd.xlane.f32.xlu0 %v120
    %v140 = vpop.xlane.xlu0 %139
    %141 = vadd.xlane.f32.xlu0 %v121
    %v142 = vpop.xlane.xlu0 %141
    %143 = vadd.xlane.f32.xlu0 %v122
    %v144 = vpop.xlane.xlu0 %143
    %145 = vadd.xlane.f32.xlu0 %v123
    %v146 = vpop.xlane.xlu0 %145
    %147 = vadd.xlane.f32.xlu0 %v124
    %v148 = vpop.xlane.xlu0 %147
    %149 = vadd.xlane.f32.xlu0 %v125
    %v150 = vpop.xlane.xlu0 %149
    %151 = vadd.xlane.f32.xlu0 %v126
    %v152 = vpop.xlane.xlu0 %151
    %153 = vadd.xlane.f32.xlu0 %v127
    %v154 = vpop.xlane.xlu0 %153
    %155 = vadd.xlane.f32.xlu0 %v128
    %v156 = vpop.xlane.xlu0 %155
    %157 = vadd.xlane.f32.xlu0 %v129
    %v158 = vpop.xlane.xlu0 %157
    %159 = vadd.xlane.f32.xlu0 %v130
    %v160 = vpop.xlane.xlu0 %159
    %161 = vadd.xlane.f32.xlu0 %v131
    %v162 = vpop.xlane.xlu0 %161
    %163 = vadd.xlane.f32.xlu0 %v132
    %v164 = vpop.xlane.xlu0 %163
    %v165 = vmul.f32 %v101, %v101
    %v166 = vmul.f32 %v102, %v102
    %v167 = vmul.f32 %v103, %v103
    %v168 = vmul.f32 %v104, %v104
    %v169 = vmul.f32 %v105, %v105
    %v170 = vmul.f32 %v106, %v106
    %v171 = vmul.f32 %v107, %v107
    %v172 = vmul.f32 %v108, %v108
    %v173 = vmul.f32 %v109, %v109
    %v174 = vmul.f32 %v110, %v110
    %v175 = vmul.f32 %v111, %v111
    %v176 = vmul.f32 %v112, %v112
    %v177 = vmul.f32 %v113, %v113
    %v178 = vmul.f32 %v114, %v114
    %v179 = vmul.f32 %v115, %v115
    %v180 = vmul.f32 %v116, %v116
    %181 = vmatpush.xpose.msra.mxu0 %v180
    %182 = vmatpush.xpose.msra.mxu0 %v179
    %183 = vmatpush.xpose.msra.mxu0 %v178
    %184 = vmatpush.xpose.msra.mxu0 %v177
    %185 = vmatpush.xpose.msra.mxu0 %v176
    %186 = vmatpush.xpose.msra.mxu0 %v175
    %187 = vmatpush.xpose.msra.mxu0 %v174
    %188 = vmatpush.xpose.msra.mxu0 %v173
    %189 = vmatpush.xpose.msra.mxu0 %v172
    %190 = vmatpush.xpose.msra.mxu0 %v171
    %191 = vmatpush.xpose.msra.mxu0 %v170
    %192 = vmatpush.xpose.msra.mxu0 %v169
    %193 = vmatpush.xpose.msra.mxu0 %v168
    %194 = vmatpush.xpose.msra.mxu0 %v167
    %195 = vmatpush.xpose.msra.mxu0 %v166
    %196 = vmatpush.xpose.msra.mxu0 %v165
    %197 = vmatmul.f32.gmra.mxu0 1.0
    %v198 = vpop.f32.mrf.mxu0
    %v199 = vadd.f32 0.0, %v198
    %200 = vdwg.mxu0
    %201 = vmatpush.xpose.msra.mxu0 %v116
    %202 = vmatpush.xpose.msra.mxu0 %v115
    %203 = vmatpush.xpose.msra.mxu0 %v114
    %204 = vmatpush.xpose.msra.mxu0 %v113
    %205 = vmatpush.xpose.msra.mxu0 %v112
    %206 = vmatpush.xpose.msra.mxu0 %v111
    %207 = vmatpush.xpose.msra.mxu0 %v110
    %208 = vmatpush.xpose.msra.mxu0 %v109
    %209 = vmatpush.xpose.msra.mxu0 %v108
    %210 = vmatpush.xpose.msra.mxu0 %v107
    %211 = vmatpush.xpose.msra.mxu0 %v106
    %212 = vmatpush.xpose.msra.mxu0 %v105
    %213 = vmatpush.xpose.msra.mxu0 %v104
    %214 = vmatpush.xpose.msra.mxu0 %v103
    %215 = vmatpush.xpose.msra.mxu0 %v102
    %216 = vmatpush.xpose.msra.mxu0 %v101
    %217 = vmatmul.f32.gmra.mxu0 %v85
    %v218 = vpop.f32.mrf.mxu0
    %v219 = vadd.f32 0.0, %v218
    %220 = vmatmul.f32.gmra.mxu0 %v86
    %v221 = vpop.f32.mrf.mxu0
    %v222 = vadd.f32 0.0, %v221
    %223 = vmatmul.f32.gmra.mxu0 %v87
    %v224 = vpop.f32.mrf.mxu0
    %v225 = vadd.f32 0.0, %v224
    %226 = vmatmul.f32.gmra.mxu0 %v88
    %v227 = vpop.f32.mrf.mxu0
    %v228 = vadd.f32 0.0, %v227
    %229 = vmatmul.f32.gmra.mxu0 %v89
    %v230 = vpop.f32.mrf.mxu0
    %v231 = vadd.f32 0.0, %v230
    %232 = vmatmul.f32.gmra.mxu0 %v90
    %v233 = vpop.f32.mrf.mxu0
    %v234 = vadd.f32 0.0, %v233
    %235 = vmatmul.f32.gmra.mxu0 %v91
    %v236 = vpop.f32.mrf.mxu0
    %v237 = vadd.f32 0.0, %v236
    %238 = vmatmul.f32.gmra.mxu0 %v92
    %v239 = vpop.f32.mrf.mxu0
    %v240 = vadd.f32 0.0, %v239
    %241 = vmatmul.f32.gmra.mxu0 %v93
    %v242 = vpop.f32.mrf.mxu0
    %v243 = vadd.f32 0.0, %v242
    %244 = vmatmul.f32.gmra.mxu0 %v94
    %v245 = vpop.f32.mrf.mxu0
    %v246 = vadd.f32 0.0, %v245
    %247 = vmatmul.f32.gmra.mxu0 %v95
    %v248 = vpop.f32.mrf.mxu0
    %v249 = vadd.f32 0.0, %v248
    %250 = vmatmul.f32.gmra.mxu0 %v96
    %v251 = vpop.f32.mrf.mxu0
    %v252 = vadd.f32 0.0, %v251
    %253 = vmatmul.f32.gmra.mxu0 %v97
    %v254 = vpop.f32.mrf.mxu0
    %v255 = vadd.f32 0.0, %v254
    %256 = vmatmul.f32.gmra.mxu0 %v98
    %v257 = vpop.f32.mrf.mxu0
    %v258 = vadd.f32 0.0, %v257
    %259 = vmatmul.f32.gmra.mxu0 %v99
    %v260 = vpop.f32.mrf.mxu0
    %v261 = vadd.f32 0.0, %v260
    %262 = vmatmul.f32.gmra.mxu0 %v100
    %v263 = vpop.f32.mrf.mxu0
    %v264 = vadd.f32 0.0, %v263
    %265 = vdwg.mxu0
    %v266 = vmul.f32 %v219, 2.0
    %v267 = vmul.f32 %v222, 2.0
    %v268 = vmul.f32 %v225, 2.0
    %v269 = vmul.f32 %v228, 2.0
    %v270 = vmul.f32 %v231, 2.0
    %v271 = vmul.f32 %v234, 2.0
    %v272 = vmul.f32 %v237, 2.0
    %v273 = vmul.f32 %v240, 2.0
    %v274 = vmul.f32 %v243, 2.0
    %v275 = vmul.f32 %v246, 2.0
    %v276 = vmul.f32 %v249, 2.0
    %v277 = vmul.f32 %v252, 2.0
    %v278 = vmul.f32 %v255, 2.0
    %v279 = vmul.f32 %v258, 2.0
    %v280 = vmul.f32 %v261, 2.0
    %v281 = vmul.f32 %v264, 2.0
    %v282 = vsub.f32 %v134, %v266
    %v283 = vsub.f32 %v136, %v267
    %v284 = vsub.f32 %v138, %v268
    %v285 = vsub.f32 %v140, %v269
    %v286 = vsub.f32 %v142, %v270
    %v287 = vsub.f32 %v144, %v271
    %v288 = vsub.f32 %v146, %v272
    %v289 = vsub.f32 %v148, %v273
    %v290 = vsub.f32 %v150, %v274
    %v291 = vsub.f32 %v152, %v275
    %v292 = vsub.f32 %v154, %v276
    %v293 = vsub.f32 %v156, %v277
    %v294 = vsub.f32 %v158, %v278
    %v295 = vsub.f32 %v160, %v279
    %v296 = vsub.f32 %v162, %v280
    %v297 = vsub.f32 %v164, %v281
    %v298 = vperm.slane %v199, 0
    %v299 = vadd.f32 %v282, %v298
    %v300 = vadd.f32 %v283, %v298
    %v301 = vadd.f32 %v284, %v298
    %v302 = vadd.f32 %v285, %v298
    %v303 = vadd.f32 %v286, %v298
    %v304 = vadd.f32 %v287, %v298
    %v305 = vadd.f32 %v288, %v298
    %v306 = vadd.f32 %v289, %v298
    %v307 = vadd.f32 %v290, %v298
    %v308 = vadd.f32 %v291, %v298
    %v309 = vadd.f32 %v292, %v298
    %v310 = vadd.f32 %v293, %v298
    %v311 = vadd.f32 %v294, %v298
    %v312 = vadd.f32 %v295, %v298
    %v313 = vadd.f32 %v296, %v298
    %v314 = vadd.f32 %v297, %v298
    %v315 = vsub.f32 1.0, %v299
    %v316 = vsub.f32 1.0, %v300
    %v317 = vsub.f32 1.0, %v301
    %v318 = vsub.f32 1.0, %v302
    %v319 = vsub.f32 1.0, %v303
    %v320 = vsub.f32 1.0, %v304
    %v321 = vsub.f32 1.0, %v305
    %v322 = vsub.f32 1.0, %v306
    %v323 = vsub.f32 1.0, %v307
    %v324 = vsub.f32 1.0, %v308
    %v325 = vsub.f32 1.0, %v309
    %v326 = vsub.f32 1.0, %v310
    %v327 = vsub.f32 1.0, %v311
    %v328 = vsub.f32 1.0, %v312
    %v329 = vsub.f32 1.0, %v313
    %v330 = vsub.f32 1.0, %v314
    %v331 = vmax.f32 %v315, 0.0
    %v332 = vmax.f32 %v316, 0.0
    %v333 = vmax.f32 %v317, 0.0
    %v334 = vmax.f32 %v318, 0.0
    %v335 = vmax.f32 %v319, 0.0
    %v336 = vmax.f32 %v320, 0.0
    %v337 = vmax.f32 %v321, 0.0
    %v338 = vmax.f32 %v322, 0.0
    %v339 = vmax.f32 %v323, 0.0
    %v340 = vmax.f32 %v324, 0.0
    %v341 = vmax.f32 %v325, 0.0
    %v342 = vmax.f32 %v326, 0.0
    %v343 = vmax.f32 %v327, 0.0
    %v344 = vmax.f32 %v328, 0.0
    %v345 = vmax.f32 %v329, 0.0
    %v346 = vmax.f32 %v330, 0.0
    %v347 = vld [vmem:[#allocation6] sm:$0xff]
    %v348 = vld [vmem:[#allocation6 + $0x8] sm:$0xff]
    %v349 = vld [vmem:[#allocation6 + $0x10] sm:$0xff]
    %v350 = vld [vmem:[#allocation6 + $0x18] sm:$0xff]
    %v351 = vld [vmem:[#allocation6 + $0x20] sm:$0xff]
    %v352 = vld [vmem:[#allocation6 + $0x28] sm:$0xff]
    %v353 = vld [vmem:[#allocation6 + $0x30] sm:$0xff]
    %v354 = vld [vmem:[#allocation6 + $0x38] sm:$0xff]
    %v355 = vld [vmem:[#allocation6 + $0x40] sm:$0xff]
    %v356 = vld [vmem:[#allocation6 + $0x48] sm:$0xff]
    %v357 = vld [vmem:[#allocation6 + $0x50] sm:$0xff]
    %v358 = vld [vmem:[#allocation6 + $0x58] sm:$0xff]
    %v359 = vld [vmem:[#allocation6 + $0x60] sm:$0xff]
    %v360 = vld [vmem:[#allocation6 + $0x68] sm:$0xff]
    %v361 = vld [vmem:[#allocation6 + $0x70] sm:$0xff]
    %v362 = vld [vmem:[#allocation6 + $0x78] sm:$0xff]
    %v363 = vmul.f32 %v347, %v331
    %v364 = vmul.f32 %v348, %v332
    %v365 = vmul.f32 %v349, %v333
    %v366 = vmul.f32 %v350, %v334
    %v367 = vmul.f32 %v351, %v335
    %v368 = vmul.f32 %v352, %v336
    %v369 = vmul.f32 %v353, %v337
    %v370 = vmul.f32 %v354, %v338
    %v371 = vmul.f32 %v355, %v339
    %v372 = vmul.f32 %v356, %v340
    %v373 = vmul.f32 %v357, %v341
    %v374 = vmul.f32 %v358, %v342
    %v375 = vmul.f32 %v359, %v343
    %v376 = vmul.f32 %v360, %v344
    %v377 = vmul.f32 %v361, %v345
    %v378 = vmul.f32 %v362, %v346
    %v379 = vld [vmem:[#allocation2] sm:$0xff]
    %v380 = vld [vmem:[%s4] sm:$0x1]
    %v382 = vperm.slane %v380, 0
    %384 = vmatpush.msra.mxu0 %v378
    %385 = vmatpush.msra.mxu0 %v377
    %386 = vmatpush.msra.mxu0 %v376
    %387 = vmatpush.msra.mxu0 %v375
    %388 = vmatpush.msra.mxu0 %v374
    %389 = vmatpush.msra.mxu0 %v373
    %390 = vmatpush.msra.mxu0 %v372
    %391 = vmatpush.msra.mxu0 %v371
    %392 = vmatpush.msra.mxu0 %v370
    %393 = vmatpush.msra.mxu0 %v369
    %394 = vmatpush.msra.mxu0 %v368
    %395 = vmatpush.msra.mxu0 %v367
    %396 = vmatpush.msra.mxu0 %v366
    %397 = vmatpush.msra.mxu0 %v365
    %398 = vmatpush.msra.mxu0 %v364
    %399 = vmatpush.msra.mxu0 %v363
    %400 = vmatmul.f32.gmra.mxu0 %v379
    %v401 = vpop.f32.mrf.mxu0
    %v402 = vadd.f32 %v382, %v401
    %403 = vdwg.mxu0
    %v404 = vxor.u32 %v402, 2147483648
    %v405 = vmul.f32 %v404, 1.442695
    %v406 = vpow.pop %v405
    %v407 = vadd.f32 %v406, 1.0
    %v408 = vrcp.pop %v407
    %v409 = vmul.f32 %v407, %v408
    %v410 = vsub.f32 1.0, %v409
    %v411 = vmul.f32 %v408, %v410
    %v412 = vadd.f32 %v408, %v411
    %vm413 = vweird.f32 %v407
    %vm414 = vweird.f32 %v408
    %vm415 = vmor %vm413, %vm414
    %v416 = vsel %vm415, %v408, %v412
    %v417 = vand.u32 2147483647, %v407
    %vm418 = vcmp.eq.f32.partialorder %v417, 8.507059e+37
    %v419 = vand.u32 %v407, 2147483648
    %v420 = vor.u32 1.1754944e-38, %v419
    %v421 = vsel %vm418, %v420, %v416
    %v422 = vmul.f32 1.0, %v421
    %423 = vst [vmem:[#allocation11] sm:$0xff] %v422
    %v424 = vlaneseq
    %v425 = vshrl.u32 %v424, 7
    %v426 = vadd.s32 %v425, 8
    %v427 = vadd.s32 %v425, 16
    %v428 = vadd.s32 %v425, 24
    %v429 = vadd.s32 %v425, 32
    %v430 = vadd.s32 %v425, 40
    %v431 = vadd.s32 %v425, 48
    %v432 = vadd.s32 %v425, 56
    %v433 = vadd.s32 %v425, 64
    %v434 = vadd.s32 %v425, 72
    %v435 = vadd.s32 %v425, 80
    %v436 = vadd.s32 %v425, 88
    %v437 = vadd.s32 %v425, 96
    %v438 = vadd.s32 %v425, 104
    %v439 = vadd.s32 %v425, 112
    %v440 = vadd.s32 %v425, 120
    %v441 = vlaneseq
    %v442 = vand.u32 %v441, 127
    %vm443 = vcmp.lt.s32.totalorder %v425, 32
    %vm444 = vcmp.lt.s32.totalorder %v426, 32
    %vm445 = vcmp.lt.s32.totalorder %v427, 32
    %vm446 = vcmp.lt.s32.totalorder %v428, 32
    %vm447 = vcmp.lt.s32.totalorder %v429, 32
    %vm448 = vcmp.lt.s32.totalorder %v430, 32
    %vm449 = vcmp.lt.s32.totalorder %v431, 32
    %vm450 = vcmp.lt.s32.totalorder %v432, 32
    %vm451 = vcmp.lt.s32.totalorder %v433, 32
    %vm452 = vcmp.lt.s32.totalorder %v434, 32
    %vm453 = vcmp.lt.s32.totalorder %v435, 32
    %vm454 = vcmp.lt.s32.totalorder %v436, 32
    %vm455 = vcmp.lt.s32.totalorder %v437, 32
    %vm456 = vcmp.lt.s32.totalorder %v438, 32
    %vm457 = vcmp.lt.s32.totalorder %v439, 32
    %vm458 = vcmp.lt.s32.totalorder %v440, 32
    %vm459 = vcmp.lt.s32.totalorder %v442, 32
    %vm460 = vmand %vm443, %vm459
    %vm461 = vmand %vm444, %vm459
    %vm462 = vmand %vm445, %vm459
    %vm463 = vmand %vm446, %vm459
    %vm464 = vmand %vm447, %vm459
    %vm465 = vmand %vm448, %vm459
    %vm466 = vmand %vm449, %vm459
    %vm467 = vmand %vm450, %vm459
    %vm468 = vmand %vm451, %vm459
    %vm469 = vmand %vm452, %vm459
    %vm470 = vmand %vm453, %vm459
    %vm471 = vmand %vm454, %vm459
    %vm472 = vmand %vm455, %vm459
    %vm473 = vmand %vm456, %vm459
    %vm474 = vmand %vm457, %vm459
    %vm475 = vmand %vm458, %vm459
    %v476 = vmul.f32 %v331, %v331
    %v477 = vmul.f32 %v332, %v332
    %v478 = vmul.f32 %v333, %v333
    %v479 = vmul.f32 %v334, %v334
    %v480 = vmul.f32 %v335, %v335
    %v481 = vmul.f32 %v336, %v336
    %v482 = vmul.f32 %v337, %v337
    %v483 = vmul.f32 %v338, %v338
    %v484 = vmul.f32 %v339, %v339
    %v485 = vmul.f32 %v340, %v340
    %v486 = vmul.f32 %v341, %v341
    %v487 = vmul.f32 %v342, %v342
    %v488 = vmul.f32 %v343, %v343
    %v489 = vmul.f32 %v344, %v344
    %v490 = vmul.f32 %v345, %v345
    %v491 = vmul.f32 %v346, %v346
    %v492 = vsel %vm460, %v476, 0.0
    %v493 = vsel %vm461, %v477, 0.0
    %v494 = vsel %vm462, %v478, 0.0
    %v495 = vsel %vm463, %v479, 0.0
    %v496 = vsel %vm464, %v480, 0.0
    %v497 = vsel %vm465, %v481, 0.0
    %v498 = vsel %vm466, %v482, 0.0
    %v499 = vsel %vm467, %v483, 0.0
    %v500 = vsel %vm468, %v484, 0.0
    %v501 = vsel %vm469, %v485, 0.0
    %v502 = vsel %vm470, %v486, 0.0
    %v503 = vsel %vm471, %v487, 0.0
    %v504 = vsel %vm472, %v488, 0.0
    %v505 = vsel %vm473, %v489, 0.0
    %v506 = vsel %vm474, %v490, 0.0
    %v507 = vsel %vm475, %v491, 0.0
    %v508 = vadd.f32 %v492, %v493
    %v509 = vadd.f32 %v508, %v494
    %v510 = vadd.f32 %v509, %v495
    %v511 = vadd.f32 %v510, %v496
    %v512 = vadd.f32 %v511, %v497
    %v513 = vadd.f32 %v512, %v498
    %v514 = vadd.f32 %v513, %v499
    %v515 = vadd.f32 %v514, %v500
    %v516 = vadd.f32 %v515, %v501
    %v517 = vadd.f32 %v516, %v502
    %v518 = vadd.f32 %v517, %v503
    %v519 = vadd.f32 %v518, %v504
    %v520 = vadd.f32 %v519, %v505
    %v521 = vadd.f32 %v520, %v506
    %v522 = vadd.f32 %v521, %v507
    %523 = vadd.xlane.f32.xlu0 %v522
    %v524 = vpop.xlane.xlu0 %523
    %v525 = vrot.slane %v524, 4
    %v526 = vadd.f32 %v524, %v525
    %v527 = vrot.slane %v526, 2
    %v528 = vadd.f32 %v526, %v527
    %v529 = vrot.slane %v528, 1
    %v530 = vadd.f32 %v528, %v529
    %s531 = vtos %v530
    %s532 = smul.f32 %s531, 5.859375e-06
    %v533 = vmul.f32 %v347, %v347
    %v534 = vmul.f32 %v348, %v348
    %v535 = vmul.f32 %v349, %v349
    %v536 = vmul.f32 %v350, %v350
    %v537 = vmul.f32 %v351, %v351
    %v538 = vmul.f32 %v352, %v352
    %v539 = vmul.f32 %v353, %v353
    %v540 = vmul.f32 %v354, %v354
    %v541 = vmul.f32 %v355, %v355
    %v542 = vmul.f32 %v356, %v356
    %v543 = vmul.f32 %v357, %v357
    %v544 = vmul.f32 %v358, %v358
    %v545 = vmul.f32 %v359, %v359
    %v546 = vmul.f32 %v360, %v360
    %v547 = vmul.f32 %v361, %v361
    %v548 = vmul.f32 %v362, %v362
    %v549 = vadd.f32 %v533, %v534
    %v550 = vadd.f32 %v549, %v535
    %v551 = vadd.f32 %v550, %v536
    %v552 = vadd.f32 %v551, %v537
    %v553 = vadd.f32 %v552, %v538
    %v554 = vadd.f32 %v553, %v539
    %v555 = vadd.f32 %v554, %v540
    %v556 = vadd.f32 %v555, %v541
    %v557 = vadd.f32 %v556, %v542
    %v558 = vadd.f32 %v557, %v543
    %v559 = vadd.f32 %v558, %v544
    %v560 = vadd.f32 %v559, %v545
    %v561 = vadd.f32 %v560, %v546
    %v562 = vadd.f32 %v561, %v547
    %v563 = vadd.f32 %v562, %v548
    %564 = vadd.xlane.f32.xlu0 %v563
    %v565 = vpop.xlane.xlu0 %564
    %v566 = vrot.slane %v565, 4
    %v567 = vadd.f32 %v565, %v566
    %v568 = vrot.slane %v567, 2
    %v569 = vadd.f32 %v567, %v568
    %v570 = vrot.slane %v569, 1
    %v571 = vadd.f32 %v569, %v570
    %s572 = vtos %v571
    %s573 = smul.f32 %s572, 0.01953125
    %s574 = sadd.f32 %s532, %s573
    %s575 = scalar_lea.smem [#allocation12], 0
    %576 = sst [smem:[%s575]] %s574
    // Predicated region
    $region38: #{tpu_custom_call.1} parent=1 // pred_check
      _
    $region39: #{tpu_custom_call.1} parent=1 // pred_check_branch
      %578 = sbr.rel (0) target = $region41
    $region40: #{tpu_custom_call.1} parent=1 // pred_region
      %580 = vsyncadd [#allocation4], 0
      %s582 = sshll.u32 [#allocation11], 4
      %s583 = int_to_ptr.vmem [resolvable:$true] %s582
      %s584 = sshll.u32 %s5, 4
      %s585 = int_to_ptr.hbm [resolvable:$true] %s584
      %587 = dma.vmem_to_hbm [thread:$0]  %s583, 128, %s585, [#allocation4]
    $region41: #{tpu_custom_call.1} parent=1 // pred_fallthru
      _
    // Predicated region
    $region42: #{tpu_custom_call.1} parent=1 // pred_check
      _
    $region43: #{tpu_custom_call.1} parent=1 // pred_check_branch
      %589 = sbr.rel (0) target = $region45
    $region44: #{tpu_custom_call.1} parent=1 // pred_region
      %591 = vsyncadd [#allocation5], 0
      %s593 = sshll.u32 %s6, 4
      %s594 = int_to_ptr.hbm [resolvable:$true] %s593
      %596 = dma.smem_to_hbm [#allocation12], 16, %s594, [#allocation5]
    $region45: #{tpu_custom_call.1} parent=1 // pred_fallthru
      _
    // Predicated region
    $region46: #{tpu_custom_call.1} parent=1 // pred_check
      _
    $region47: #{tpu_custom_call.1} parent=1 // pred_check_branch
      %598 = sbr.rel (0) target = $region49
    $region48: #{tpu_custom_call.1} parent=1 // pred_region
      %600 = dma.done [#allocation4], 128
    $region49: #{tpu_custom_call.1} parent=1 // pred_fallthru
      _
    // Predicated region
    $region50: #{tpu_custom_call.1} parent=1 // pred_check
      _
    $region51: #{tpu_custom_call.1} parent=1 // pred_check_branch
      %602 = sbr.rel (0) target = $region53
    $region52: #{tpu_custom_call.1} parent=1 // pred_region
      %604 = dma.done [#allocation5], 16
    $region53: #{tpu_custom_call.1} parent=1 // pred_fallthru
      _
    %605 = sfence
    %606 = vsyncpa [#allocation3], 1
    %607 = vsyncpa [#allocation7], 1
    %608 = vsyncpa [#allocation10], 1
    %609 = vsyncpa [#allocation4], 1
    %610 = vsyncpa [#allocation5], 1

</llo_original>
